<compile_context>
chip_gen: v5e
topology: v5e:2x2
jax: 0.10.0
libtpu: 0.0.40
codegen_flags: <defaults>
</compile_context>

<pallas_src>
import functools

import jax
import jax.numpy as jnp
from jax.experimental import pallas as pl
from jax.experimental.pallas import tpu as pltpu

HIDDEN = 64  # fixed by the module: nn.Linear(64, num_of_class)


def _round_up(x, m):
    return (x + m - 1) // m * m


def _linear_kernel(x_ref, w_ref, b_ref, o_ref):
    # One fused MXU matmul + VPU bias add per batch tile; f32 accumulation.
    o_ref[...] = (
        jnp.dot(x_ref[...], w_ref[...], preferred_element_type=jnp.float32)
        + b_ref[...]
    ).astype(o_ref.dtype)


@functools.partial(jax.jit, static_argnames=("use_bf16", "tile_rows"))
def sc_classifier_forward(embedding, w, b, *, use_bf16=False, tile_rows=512):
    """Pallas equivalent of sc_classifier.forward.

    embedding: (..., 64) activations.
    w: (64, C) weight, already transposed relative to PyTorch's (C, 64).
    b: (C,) bias.
    Returns cell_prediction of shape (..., C), float32.
    """
    C = w.shape[1]
    x = embedding.astype(jnp.float32).reshape(-1, HIDDEN)
    B = x.shape[0]

    # Pad to MXU / lane friendly sizes.
    K_pad = _round_up(HIDDEN, 128)          # contraction dim 64 -> 128
    C_pad = _round_up(C, 128)               # lane-dense output stores
    TB = min(tile_rows, _round_up(B, 8))    # batch tile (multiple of 8 sublanes)
    B_pad = _round_up(B, TB)

    compute_dtype = jnp.bfloat16 if use_bf16 else jnp.float32
    x_p = (
        jnp.zeros((B_pad, K_pad), compute_dtype)
        .at[:B, :HIDDEN]
        .set(x.astype(compute_dtype))
    )
    w_p = (
        jnp.zeros((K_pad, C_pad), compute_dtype)
        .at[:HIDDEN, :C]
        .set(w.astype(compute_dtype))
    )
    b_p = jnp.zeros((1, C_pad), jnp.float32).at[0, :C].set(b.astype(jnp.float32))

    grid = (B_pad // TB,)
    pred_p = pl.pallas_call(
        _linear_kernel,
        out_shape=jax.ShapeDtypeStruct((B_pad, C_pad), jnp.float32),
        grid=grid,
        in_specs=[
            pl.BlockSpec((TB, K_pad), lambda i: (i, 0)),        # streamed batch tile
            pl.BlockSpec((K_pad, C_pad), lambda i: (0, 0)),     # resident weight
            pl.BlockSpec((1, C_pad), lambda i: (0, 0)),         # resident bias
        ],
        out_specs=pl.BlockSpec((TB, C_pad), lambda i: (i, 0)),
        compiler_params=pltpu.CompilerParams(
            dimension_semantics=("parallel",)),                  # megacore on v7x
    )(x_p, w_p, b_p)

    pred = pred_p[:B, :C]
    return pred.reshape(*embedding.shape[:-1], C)


def init_params(key, num_of_class, hidden=HIDDEN):
    """Mirror nn.Linear's U(-1/sqrt(fan_in), 1/sqrt(fan_in)) init.

    Weight is stored pre-transposed as (hidden, num_of_class).
    """
    k1, k2 = jax.random.split(key)
    bound = 1.0 / (hidden ** 0.5)
    w = jax.random.uniform(k1, (hidden, num_of_class), jnp.float32, -bound, bound)
    b = jax.random.uniform(k2, (num_of_class,), jnp.float32, -bound, bound)
    return w, b


if __name__ == "__main__":
    batch = 8
    num_of_class = 10

    key = jax.random.PRNGKey(0)
    kx, kp = jax.random.split(key)
    embedding = jax.random.normal(kx, (batch, HIDDEN), jnp.float32)
    w, b = init_params(kp, num_of_class)

    pred = sc_classifier_forward(embedding, w, b)
    jax.block_until_ready(pred)

    # Sanity check against plain JAX reference (f32 path -> tight tolerance).
    pred_ref = embedding @ w + b
    assert pred.shape == (batch, num_of_class)
    assert jnp.allclose(pred, pred_ref, atol=1e-5, rtol=1e-5)

    # Exercise the bf16 fast path too (looser tolerance, still f32 accumulation).
    pred_bf16 = sc_classifier_forward(embedding, w, b, use_bf16=True)
    jax.block_until_ready(pred_bf16)
    assert jnp.allclose(pred_bf16, pred_ref, atol=2e-2, rtol=2e-2)

    print("KERNEL_OK")
</pallas_src>

<mosaic_0001>
module attributes {stable_mosaic.version = 11 : i64} {
  func.func @_linear_kernel(%arg0: i32, %arg1: memref<8x128xf32, #tpu.memory_space<vmem>>, %arg2: memref<128x128xf32, #tpu.memory_space<vmem>>, %arg3: memref<1x128xf32, #tpu.memory_space<vmem>>, %arg4: memref<8x128xf32, #tpu.memory_space<vmem>>) attributes {dimension_semantics = [#tpu.dimension_semantics<parallel>], iteration_bounds = array<i64: 1>, scalar_prefetch = 0 : i64, scratch_operands = 0 : i64, tpu.core_type = #tpu.core_type<tc>, window_params = [{transform_indices = @transform_0, window_bounds = array<i64: 8, 128>}, {pipeline_mode = #tpu.pipeline_mode<synchronous>, transform_indices = @transform_1, window_bounds = array<i64: 128, 128>}, {pipeline_mode = #tpu.pipeline_mode<synchronous>, transform_indices = @transform_2, window_bounds = array<i64: 1, 128>}, {transform_indices = @transform_3, window_bounds = array<i64: 8, 128>}]} {
    %c0 = arith.constant 0 : index
    %c0_0 = arith.constant 0 : index
    %0 = vector.load %arg1[%c0, %c0_0] : memref<8x128xf32, #tpu.memory_space<vmem>>, vector<8x128xf32>
    %c0_1 = arith.constant 0 : index
    %c0_2 = arith.constant 0 : index
    %1 = vector.load %arg2[%c0_1, %c0_2] : memref<128x128xf32, #tpu.memory_space<vmem>>, vector<128x128xf32>
    %cst = arith.constant dense<0.000000e+00> : vector<8x128xf32>
    %2 = tpu.matmul %0, %1, %cst {dimension_numbers = #tpu.dot_dimension_numbers<[1], [0], [0], [1], [0, 0, 1, 1], [], []>} : vector<8x128xf32>, vector<128x128xf32>, vector<8x128xf32> -> vector<8x128xf32>
    %c0_3 = arith.constant 0 : index
    %c0_4 = arith.constant 0 : index
    %3 = vector.load %arg3[%c0_3, %c0_4] : memref<1x128xf32, #tpu.memory_space<vmem>>, vector<1x128xf32>
    %4 = vector.broadcast %3 : vector<1x128xf32> to vector<8x128xf32>
    %5 = arith.addf %2, %4 : vector<8x128xf32>
    %c0_5 = arith.constant 0 : index
    %c0_6 = arith.constant 0 : index
    %6 = vector.load %arg4[%c0_5, %c0_6] : memref<8x128xf32, #tpu.memory_space<vmem>>, vector<8x128xf32>
    tpu.vector_store %arg4[%c0_5, %c0_6], %5 {strides = array<i32>} : memref<8x128xf32, #tpu.memory_space<vmem>>, vector<8x128xf32>,
    return
  }
  func.func @transform_0(%arg0: i32) -> (i32, i32) {
    %c0_i32 = arith.constant 0 : i32
    %c0_i32_0 = arith.constant 0 : i32
    return %arg0, %c0_i32 : i32, i32
  }
  func.func @transform_1(%arg0: i32) -> (i32, i32) {
    %c0_i32 = arith.constant 0 : i32
    %c0_i32_0 = arith.constant 0 : i32
    %c0_i32_1 = arith.constant 0 : i32
    return %c0_i32, %c0_i32_0 : i32, i32
  }
  func.func @transform_2(%arg0: i32) -> (i32, i32) {
    %c0_i32 = arith.constant 0 : i32
    %c0_i32_0 = arith.constant 0 : i32
    %c0_i32_1 = arith.constant 0 : i32
    return %c0_i32, %c0_i32_0 : i32, i32
  }
  func.func @transform_3(%arg0: i32) -> (i32, i32) {
    %c0_i32 = arith.constant 0 : i32
    %c0_i32_0 = arith.constant 0 : i32
    return %arg0, %c0_i32 : i32, i32
  }
}

</mosaic_0001>

<llo_original>
// kernel: sc_classifier_forward.1
$region0: #{sc_classifier_forward.1}
  #allocation0 [shape = 'u32[]', space=smem, size = 0x4, offset = 0x4, fixed_abs, tag = 'smem constant byte address 0x4 - core index']
  #allocation1 [shape = 'u32[72,128]{1,0:T(1,128)}', space=vmem, size = 0x9000, scoped, tag = 'internal scratch']
  %s0 = inlined_call_operand.vmem [shape: f32[8,128], index: 0, kind: input, shape index: {}]
  %s1 = inlined_call_operand.vmem [shape: f32[128,128], index: 1, kind: input, shape index: {}]
  %s2 = inlined_call_operand.vmem [shape: f32[1,128], index: 2, kind: input, shape index: {}]
  %s3 = inlined_call_operand.hbm [shape: f32[8,128], index: 3, kind: output, shape index: {}]
  %s4 = sld [smem:[#allocation0]]
  $region22: #{sc_classifier_forward.1} parent=0
    _
  %s6 = ssub.s32 1, %s4
  %s7 = scalar_select 0, %s6, %s4
  $region1: #{sc_classifier_forward.1} parent=0
    #allocation2 [shape = 'u8[4096]{0}', space=vmem, size = 0x1000, scoped, tag = 'output window, operand 0, single buffered']
    #allocation3 [shape = 's32[1]{0}', space=sflag, size = 0x4, scoped, tag = 'scoped memory for sc_classifier_forward.1']
    %8 = vsyncpa [#allocation3], 0
    // Predicated region
    $region2: #{sc_classifier_forward.1} parent=1 // pred_check
      _
    $region3: #{sc_classifier_forward.1} parent=1 // pred_check_branch
      %10 = sbr.rel (0) target = $region5
    $region4: #{sc_classifier_forward.1} parent=1 // pred_region
      _
    $region5: #{sc_classifier_forward.1} parent=1 // pred_fallthru
      _
    // Predicated region
    $region6: #{sc_classifier_forward.1} parent=1 // pred_check
      _
    $region7: #{sc_classifier_forward.1} parent=1 // pred_check_branch
      %12 = sbr.rel (0) target = $region9
    $region8: #{sc_classifier_forward.1} parent=1 // pred_region
      _
    $region9: #{sc_classifier_forward.1} parent=1 // pred_fallthru
      _
    // Predicated region
    $region10: #{sc_classifier_forward.1} parent=1 // pred_check
      _
    $region11: #{sc_classifier_forward.1} parent=1 // pred_check_branch
      %14 = sbr.rel (0) target = $region13
    $region12: #{sc_classifier_forward.1} parent=1 // pred_region
      _
    $region13: #{sc_classifier_forward.1} parent=1 // pred_fallthru
      _
    %v15 = vld [vmem:[%s0] sm:$0xff]
    %v16 = vld [vmem:[%s1] sm:$0xff]
    %v17 = vld [vmem:[%s1 + $0x8] sm:$0xff]
    %v18 = vld [vmem:[%s1 + $0x10] sm:$0xff]
    %v19 = vld [vmem:[%s1 + $0x18] sm:$0xff]
    %v20 = vld [vmem:[%s1 + $0x20] sm:$0xff]
    %v21 = vld [vmem:[%s1 + $0x28] sm:$0xff]
    %v22 = vld [vmem:[%s1 + $0x30] sm:$0xff]
    %v23 = vld [vmem:[%s1 + $0x38] sm:$0xff]
    %v24 = vld [vmem:[%s1 + $0x40] sm:$0xff]
    %v25 = vld [vmem:[%s1 + $0x48] sm:$0xff]
    %v26 = vld [vmem:[%s1 + $0x50] sm:$0xff]
    %v27 = vld [vmem:[%s1 + $0x58] sm:$0xff]
    %v28 = vld [vmem:[%s1 + $0x60] sm:$0xff]
    %v29 = vld [vmem:[%s1 + $0x68] sm:$0xff]
    %v30 = vld [vmem:[%s1 + $0x70] sm:$0xff]
    %v31 = vld [vmem:[%s1 + $0x78] sm:$0xff]
    %v32 = vld [vmem:[%s2] sm:$0x1]
    %v34 = vperm.slane %v32, 0
    %36 = vmatpush.msra.mxu0 %v31
    %37 = vmatpush.msra.mxu0 %v30
    %38 = vmatpush.msra.mxu0 %v29
    %39 = vmatpush.msra.mxu0 %v28
    %40 = vmatpush.msra.mxu0 %v27
    %41 = vmatpush.msra.mxu0 %v26
    %42 = vmatpush.msra.mxu0 %v25
    %43 = vmatpush.msra.mxu0 %v24
    %44 = vmatpush.msra.mxu0 %v23
    %45 = vmatpush.msra.mxu0 %v22
    %46 = vmatpush.msra.mxu0 %v21
    %47 = vmatpush.msra.mxu0 %v20
    %48 = vmatpush.msra.mxu0 %v19
    %49 = vmatpush.msra.mxu0 %v18
    %50 = vmatpush.msra.mxu0 %v17
    %51 = vmatpush.msra.mxu0 %v16
    %52 = vmatmul.f32.gmra.mxu0 %v15
    %v53 = vpop.f32.mrf.mxu0
    %v54 = vadd.f32 %v34, %v53
    %55 = vdwg.mxu0
    %56 = vst [vmem:[#allocation2] sm:$0xff] %v54
    // Predicated region
    $region14: #{sc_classifier_forward.1} parent=1 // pred_check
      _
    $region15: #{sc_classifier_forward.1} parent=1 // pred_check_branch
      %58 = sbr.rel (0) target = $region17
    $region16: #{sc_classifier_forward.1} parent=1 // pred_region
      %60 = vsyncadd [#allocation3], 0
      %s62 = sshll.u32 [#allocation2], 4
      %s63 = int_to_ptr.vmem [resolvable:$true] %s62
      %s64 = sshll.u32 %s3, 4
      %s65 = int_to_ptr.hbm [resolvable:$true] %s64
      %67 = dma.vmem_to_hbm [thread:$0]  %s63, 128, %s65, [#allocation3]
    $region17: #{sc_classifier_forward.1} parent=1 // pred_fallthru
      _
    // Predicated region
    $region18: #{sc_classifier_forward.1} parent=1 // pred_check
      _
    $region19: #{sc_classifier_forward.1} parent=1 // pred_check_branch
      %69 = sbr.rel (0) target = $region21
    $region20: #{sc_classifier_forward.1} parent=1 // pred_region
      %71 = dma.done [#allocation3], 128
    $region21: #{sc_classifier_forward.1} parent=1 // pred_fallthru
      _
    %72 = vsyncpa [#allocation3], 1

</llo_original>
